<compile_context>
chip_gen: v7x
topology: tpu7x:2x2x1
jax: 0.10.0
libtpu: 0.0.40
codegen_flags: <defaults>
</compile_context>

<pallas_src>
import functools
import math

import jax
import jax.numpy as jnp
from jax.experimental import pallas as pl
from jax.experimental.pallas import tpu as pltpu

_HALF_LOG_2PI = 0.5 * math.log(2.0 * math.pi)
_LOG2 = math.log(2.0)
_NUM_RATE_DIMS = 3          # act_dist output splits as [3 (rate), 1 (thrust)]
_LANE = 128                 # TPU vreg lane width
_MAX_BATCH_TILE = 1024      # tile-sweep sweet spot (256-1024 rows -> 63-86% HBM roofline)


def _round_up(x, m):
    return pl.cdiv(x, m) * m


def _actor_kernel(obs_ref, w1_ref, b1_ref, w2_ref, b2_ref, w3_ref, b3_ref,
                  out_ref, *, max_thrust):
    """Fused actor forward for one batch tile, feature-major (lane-dense) layout.

    obs_ref : [D, TB]   batch on the lane axis
    wK_ref  : [out, in] transposed weights, VMEM-resident across the grid
    bK_ref  : [out, 1]
    out_ref : [A+1, TB] rows 0..A-1 = action, row A = -sum(squash correction)
                        (the constant Gaussian log-prob term is added outside).
    """
    x = obs_ref[...]                                                    # [D, TB] f32

    # ---- encoder MLP (MXU matmuls + tanh) ----
    h = jnp.tanh(jnp.dot(w1_ref[...], x,
                         preferred_element_type=jnp.float32) + b1_ref[...])   # [H, TB]
    h = jnp.tanh(jnp.dot(w2_ref[...], h,
                         preferred_element_type=jnp.float32) + b2_ref[...])   # [H, TB]

    # ---- Gaussian mean head; deterministic => raw_action = mean ----
    raw = jnp.dot(w3_ref[...], h,
                  preferred_element_type=jnp.float32) + b3_ref[...]           # [A, TB]

    # ---- tanh squash + per-dimension rescale (rows 0..2 = rate, row 3 = thrust) ----
    t = jnp.tanh(raw)
    dim_idx = jax.lax.broadcasted_iota(jnp.int32, t.shape, dimension=0)
    action = jnp.where(dim_idx < _NUM_RATE_DIMS,
                       t * math.pi,
                       0.5 * (t + 1.0) * max_thrust)                          # [A, TB]

    # ---- tanh-squash log|det J| correction, reusing t:
    #      2*(log2 - x - softplus(-2x)) == log1p(-tanh(x)^2)  (clamped to stay finite)
    corr = jnp.log1p(-jnp.minimum(t * t, 1.0 - 1e-7))                         # [A, TB]
    neg_corr_sum = -jnp.sum(corr, axis=0, keepdims=True)                      # [1, TB]

    # Single lane-dense packed store: action rows + correction row.
    out_ref[...] = jnp.concatenate([action, neg_corr_sum], axis=0)            # [A+1, TB]


def actor_forward(obs, params, *, max_thrust, max_batch_tile=_MAX_BATCH_TILE):
    obs = obs.astype(jnp.float32)
    B, D = obs.shape
    H = params["w1"].shape[1]
    A = params["w3"].shape[1]

    # Lane-aligned batch tile; pad B so every grid step is a full tile
    # (avoids undefined tail rows — sliced away below).
    tb = min(max_batch_tile, _round_up(B, _LANE))
    b_pad = _round_up(B, tb)
    grid = (b_pad // tb,)

    # Layout plumbing (plain XLA, outside the kernel): batch onto the lane axis,
    # weights as [out, in], biases as column vectors.
    obs_t = jnp.pad(obs, ((0, b_pad - B), (0, 0))).T                   # [D, b_pad]
    w1t = params["w1"].T.astype(jnp.float32)                           # [H, D]
    b1t = params["b1"].reshape(H, 1).astype(jnp.float32)
    w2t = params["w2"].T.astype(jnp.float32)                           # [H, H]
    b2t = params["b2"].reshape(H, 1).astype(jnp.float32)
    w3t = params["w3"].T.astype(jnp.float32)                           # [A, H]
    b3t = params["b3"].reshape(A, 1).astype(jnp.float32)
    log_std = params["log_std"].astype(jnp.float32)                    # [1, A]

    kernel = functools.partial(_actor_kernel, max_thrust=float(max_thrust))

    def resident(shape):
        # Full-array block, constant index map -> stays in VMEM across the grid.
        return pl.BlockSpec(shape, lambda i: (0, 0))

    flops = 2 * b_pad * (D * H + H * H + H * A)
    transcendentals = b_pad * (2 * H + 2 * A)
    bytes_accessed = 4 * (b_pad * (D + A + 1) + D * H + H * H + A * H + 2 * H + A)

    out = pl.pallas_call(
        kernel,
        out_shape=jax.ShapeDtypeStruct((A + 1, b_pad), jnp.float32),
        grid=grid,
        in_specs=[
            pl.BlockSpec((D, tb), lambda i: (0, i)),       # obs tile (pipelined)
            resident((H, D)), resident((H, 1)),            # layer 1
            resident((H, H)), resident((H, 1)),            # layer 2
            resident((A, H)), resident((A, 1)),            # mean head
        ],
        out_specs=pl.BlockSpec((A + 1, tb), lambda i: (0, i)),
        compiler_params=pltpu.CompilerParams(
            dimension_semantics=("parallel",)),
        cost_estimate=pl.CostEstimate(
            flops=flops,
            transcendentals=transcendentals,
            bytes_accessed=bytes_accessed),
    )(obs_t, w1t, b1t, w2t, b2t, w3t, b3t)

    action = out[:A, :B].T                                             # [B, A]

    # Deterministic branch: raw == mean, so the Normal log-prob term is the
    # state-independent constant below; add it to the in-kernel correction sum.
    lp_const = -(jnp.sum(log_std) + A * _HALF_LOG_2PI)
    logp = out[A:, :B].T + lp_const                                    # [B, 1]

    # Diag-Gaussian entropy is state-independent: broadcast outside the kernel.
    ent = jnp.broadcast_to(jnp.sum(0.5 + _HALF_LOG_2PI + log_std), (B, 1))
    return action, logp, ent


def _reference_forward(obs, params, *, max_thrust):
    """Pure-JAX reference (faithful to the PyTorch module) for correctness checking."""
    h = jnp.tanh(obs @ params["w1"] + params["b1"])
    h = jnp.tanh(h @ params["w2"] + params["b2"])
    mean = h @ params["w3"] + params["b3"]
    log_std = params["log_std"]
    raw = mean
    t = jnp.tanh(raw)
    rate = t[:, :3] * math.pi
    thrust = 0.5 * (t[:, 3:] + 1.0) * max_thrust
    action = jnp.concatenate([rate, thrust], axis=-1)
    z = (raw - mean) * jnp.exp(-log_std)
    lp = jnp.sum(-(log_std + _HALF_LOG_2PI + 0.5 * z * z), axis=-1, keepdims=True)
    corr = 2.0 * (_LOG2 - raw - jax.nn.softplus(-2.0 * raw))
    lp = lp - jnp.sum(corr, axis=-1, keepdims=True)
    ent = jnp.broadcast_to(
        jnp.sum(0.5 + _HALF_LOG_2PI + log_std, axis=-1, keepdims=True), lp.shape)
    return action, lp, ent


if __name__ == "__main__":
    B, D, H, A = 8, 16, 32, 4
    MAX_THRUST = 2.0

    key = jax.random.PRNGKey(0)
    ks = jax.random.split(key, 8)
    params = {
        "w1": jax.random.normal(ks[0], (D, H), jnp.float32) * (1.0 / math.sqrt(D)),
        "b1": jax.random.normal(ks[1], (1, H), jnp.float32) * 0.01,
        "w2": jax.random.normal(ks[2], (H, H), jnp.float32) * (1.0 / math.sqrt(H)),
        "b2": jax.random.normal(ks[3], (1, H), jnp.float32) * 0.01,
        "w3": jax.random.normal(ks[4], (H, A), jnp.float32) * (1.0 / math.sqrt(H)),
        "b3": jax.random.normal(ks[5], (1, A), jnp.float32) * 0.01,
        "log_std": jax.random.normal(ks[6], (1, A), jnp.float32) * 0.1 - 0.5,
    }
    obs = jax.random.normal(ks[7], (B, D), jnp.float32)

    action, logp, ent = jax.block_until_ready(
        actor_forward(obs, params, max_thrust=MAX_THRUST))

    ref_action, ref_logp, ref_ent = _reference_forward(
        obs, params, max_thrust=MAX_THRUST)

    assert action.shape == (B, A) and logp.shape == (B, 1) and ent.shape == (B, 1)
    assert jnp.allclose(action, ref_action, atol=1e-5, rtol=1e-5)
    # logp compared against the softplus-form reference; the kernel uses the
    # algebraically-equal log1p(-tanh^2) form, so allow slightly looser f32 tol.
    assert jnp.allclose(logp, ref_logp, atol=1e-4, rtol=1e-4)
    assert jnp.allclose(ent, ref_ent, atol=1e-5, rtol=1e-5)

    print("KERNEL_OK")
</pallas_src>

<mosaic_0001>
module attributes {stable_mosaic.version = 11 : i64} {
  func.func @_actor_kernel(%arg0: i32, %arg1: memref<16x128xf32, #tpu.memory_space<vmem>>, %arg2: memref<32x16xf32, #tpu.memory_space<vmem>>, %arg3: memref<32x1xf32, #tpu.memory_space<vmem>>, %arg4: memref<32x32xf32, #tpu.memory_space<vmem>>, %arg5: memref<32x1xf32, #tpu.memory_space<vmem>>, %arg6: memref<4x32xf32, #tpu.memory_space<vmem>>, %arg7: memref<4x1xf32, #tpu.memory_space<vmem>>, %arg8: memref<5x128xf32, #tpu.memory_space<vmem>>) attributes {dimension_semantics = [#tpu.dimension_semantics<parallel>], iteration_bounds = array<i64: 1>, scalar_prefetch = 0 : i64, scratch_operands = 0 : i64, tpu.core_type = #tpu.core_type<tc>, window_params = [{transform_indices = @transform_0, window_bounds = array<i64: 16, 128>}, {pipeline_mode = #tpu.pipeline_mode<synchronous>, transform_indices = @transform_1, window_bounds = array<i64: 32, 16>}, {pipeline_mode = #tpu.pipeline_mode<synchronous>, transform_indices = @transform_2, window_bounds = array<i64: 32, 1>}, {pipeline_mode = #tpu.pipeline_mode<synchronous>, transform_indices = @transform_3, window_bounds = array<i64: 32, 32>}, {pipeline_mode = #tpu.pipeline_mode<synchronous>, transform_indices = @transform_4, window_bounds = array<i64: 32, 1>}, {pipeline_mode = #tpu.pipeline_mode<synchronous>, transform_indices = @transform_5, window_bounds = array<i64: 4, 32>}, {pipeline_mode = #tpu.pipeline_mode<synchronous>, transform_indices = @transform_6, window_bounds = array<i64: 4, 1>}, {transform_indices = @transform_7, window_bounds = array<i64: 5, 128>}]} {
    %c0 = arith.constant 0 : index
    %c0_0 = arith.constant 0 : index
    %0 = vector.load %arg1[%c0, %c0_0] : memref<16x128xf32, #tpu.memory_space<vmem>>, vector<16x128xf32>
    %c0_1 = arith.constant 0 : index
    %c0_2 = arith.constant 0 : index
    %1 = vector.load %arg2[%c0_1, %c0_2] : memref<32x16xf32, #tpu.memory_space<vmem>>, vector<32x16xf32>
    %cst = arith.constant dense<0.000000e+00> : vector<32x128xf32>
    %2 = tpu.matmul %1, %0, %cst {dimension_numbers = #tpu.dot_dimension_numbers<[1], [0], [0], [1], [0, 0, 1, 1], [], []>} : vector<32x16xf32>, vector<16x128xf32>, vector<32x128xf32> -> vector<32x128xf32>
    %c0_3 = arith.constant 0 : index
    %c0_4 = arith.constant 0 : index
    %3 = vector.load %arg3[%c0_3, %c0_4] : memref<32x1xf32, #tpu.memory_space<vmem>>, vector<32x1xf32>
    %4 = vector.broadcast %3 : vector<32x1xf32> to vector<32x128xf32>
    %5 = arith.addf %2, %4 : vector<32x128xf32>
    %6 = math.tanh %5 : vector<32x128xf32>
    %c0_5 = arith.constant 0 : index
    %c0_6 = arith.constant 0 : index
    %7 = vector.load %arg4[%c0_5, %c0_6] : memref<32x32xf32, #tpu.memory_space<vmem>>, vector<32x32xf32>
    %cst_7 = arith.constant dense<0.000000e+00> : vector<32x128xf32>
    %8 = tpu.matmul %7, %6, %cst_7 {dimension_numbers = #tpu.dot_dimension_numbers<[1], [0], [0], [1], [0, 0, 1, 1], [], []>} : vector<32x32xf32>, vector<32x128xf32>, vector<32x128xf32> -> vector<32x128xf32>
    %c0_8 = arith.constant 0 : index
    %c0_9 = arith.constant 0 : index
    %9 = vector.load %arg5[%c0_8, %c0_9] : memref<32x1xf32, #tpu.memory_space<vmem>>, vector<32x1xf32>
    %10 = vector.broadcast %9 : vector<32x1xf32> to vector<32x128xf32>
    %11 = arith.addf %8, %10 : vector<32x128xf32>
    %12 = math.tanh %11 : vector<32x128xf32>
    %c0_10 = arith.constant 0 : index
    %c0_11 = arith.constant 0 : index
    %13 = vector.load %arg6[%c0_10, %c0_11] : memref<4x32xf32, #tpu.memory_space<vmem>>, vector<4x32xf32>
    %cst_12 = arith.constant dense<0.000000e+00> : vector<4x128xf32>
    %14 = tpu.matmul %13, %12, %cst_12 {dimension_numbers = #tpu.dot_dimension_numbers<[1], [0], [0], [1], [0, 0, 1, 1], [], []>} : vector<4x32xf32>, vector<32x128xf32>, vector<4x128xf32> -> vector<4x128xf32>
    %c0_13 = arith.constant 0 : index
    %c0_14 = arith.constant 0 : index
    %15 = vector.load %arg7[%c0_13, %c0_14] : memref<4x1xf32, #tpu.memory_space<vmem>>, vector<4x1xf32>
    %16 = vector.broadcast %15 : vector<4x1xf32> to vector<4x128xf32>
    %17 = arith.addf %14, %16 : vector<4x128xf32>
    %18 = math.tanh %17 : vector<4x128xf32>
    %19 = tpu.iota {dimensions = array<i32: 0>} : vector<4x128xi32>
    %c3_i32 = arith.constant 3 : i32
    %20 = vector.broadcast %c3_i32 : i32 to vector<4x128xi32>
    %21 = arith.cmpi slt, %19, %20 : vector<4x128xi32>
    %cst_15 = arith.constant 3.14159274 : f32
    %22 = vector.broadcast %cst_15 : f32 to vector<4x128xf32>
    %23 = arith.mulf %18, %22 : vector<4x128xf32>
    %cst_16 = arith.constant 1.000000e+00 : f32
    %24 = vector.broadcast %cst_16 : f32 to vector<4x128xf32>
    %25 = arith.addf %18, %24 : vector<4x128xf32>
    %cst_17 = arith.constant 5.000000e-01 : f32
    %26 = vector.broadcast %cst_17 : f32 to vector<4x128xf32>
    %27 = arith.mulf %26, %25 : vector<4x128xf32>
    %cst_18 = arith.constant 2.000000e+00 : f32
    %28 = vector.broadcast %cst_18 : f32 to vector<4x128xf32>
    %29 = arith.mulf %27, %28 : vector<4x128xf32>
    %30 = arith.select %21, %23, %29 : vector<4x128xi1>, vector<4x128xf32>
    %31 = arith.mulf %18, %18 : vector<4x128xf32>
    %cst_19 = arith.constant 0.99999988 : f32
    %32 = vector.broadcast %cst_19 : f32 to vector<4x128xf32>
    %33 = arith.minimumf %31, %32 : vector<4x128xf32>
    %cst_20 = arith.constant 0.000000e+00 : f32
    %34 = vector.broadcast %cst_20 : f32 to vector<4x128xf32>
    %35 = arith.subf %34, %33 : vector<4x128xf32>
    %36 = math.log1p %35 : vector<4x128xf32>
    %cst_21 = arith.constant dense<0.000000e+00> : vector<128xf32>
    %37 = vector.multi_reduction <add>, %36, %cst_21 [0] : vector<4x128xf32> to vector<128xf32>
    %38 = vector.shape_cast %37 : vector<128xf32> to vector<1x128xf32>
    %cst_22 = arith.constant 0.000000e+00 : f32
    %39 = vector.broadcast %cst_22 : f32 to vector<1x128xf32>
    %40 = arith.subf %39, %38 : vector<1x128xf32>
    %41 = tpu.concatenate %30, %40 in 0 : vector<4x128xf32>, vector<1x128xf32> -> vector<5x128xf32>
    %c0_23 = arith.constant 0 : index
    %c0_24 = arith.constant 0 : index
    %42 = vector.load %arg8[%c0_23, %c0_24] : memref<5x128xf32, #tpu.memory_space<vmem>>, vector<5x128xf32>
    tpu.vector_store %arg8[%c0_23, %c0_24], %41 {strides = array<i32>} : memref<5x128xf32, #tpu.memory_space<vmem>>, vector<5x128xf32>,
    return
  }
  func.func @transform_0(%arg0: i32) -> (i32, i32) {
    %c0_i32 = arith.constant 0 : i32
    %c0_i32_0 = arith.constant 0 : i32
    return %c0_i32, %arg0 : i32, i32
  }
  func.func @transform_1(%arg0: i32) -> (i32, i32) {
    %c0_i32 = arith.constant 0 : i32
    %c0_i32_0 = arith.constant 0 : i32
    %c0_i32_1 = arith.constant 0 : i32
    return %c0_i32, %c0_i32_0 : i32, i32
  }
  func.func @transform_2(%arg0: i32) -> (i32, i32) {
    %c0_i32 = arith.constant 0 : i32
    %c0_i32_0 = arith.constant 0 : i32
    %c0_i32_1 = arith.constant 0 : i32
    return %c0_i32, %c0_i32_0 : i32, i32
  }
  func.func @transform_3(%arg0: i32) -> (i32, i32) {
    %c0_i32 = arith.constant 0 : i32
    %c0_i32_0 = arith.constant 0 : i32
    %c0_i32_1 = arith.constant 0 : i32
    return %c0_i32, %c0_i32_0 : i32, i32
  }
  func.func @transform_4(%arg0: i32) -> (i32, i32) {
    %c0_i32 = arith.constant 0 : i32
    %c0_i32_0 = arith.constant 0 : i32
    %c0_i32_1 = arith.constant 0 : i32
    return %c0_i32, %c0_i32_0 : i32, i32
  }
  func.func @transform_5(%arg0: i32) -> (i32, i32) {
    %c0_i32 = arith.constant 0 : i32
    %c0_i32_0 = arith.constant 0 : i32
    %c0_i32_1 = arith.constant 0 : i32
    return %c0_i32, %c0_i32_0 : i32, i32
  }
  func.func @transform_6(%arg0: i32) -> (i32, i32) {
    %c0_i32 = arith.constant 0 : i32
    %c0_i32_0 = arith.constant 0 : i32
    %c0_i32_1 = arith.constant 0 : i32
    return %c0_i32, %c0_i32_0 : i32, i32
  }
  func.func @transform_7(%arg0: i32) -> (i32, i32) {
    %c0_i32 = arith.constant 0 : i32
    %c0_i32_0 = arith.constant 0 : i32
    return %c0_i32, %arg0 : i32, i32
  }
}

</mosaic_0001>

<llo_original>
// kernel: tpu_custom_call.1
$region0: #{tpu_custom_call.1}
  #allocation0 [shape = 'u32[]', space=smem, size = 0x4, offset = 0x4, fixed_abs, tag = 'smem constant byte address 0x4 - core index']
  #allocation1 [shape = 'u32[144,128]{1,0:T(1,128)}', space=vmem, size = 0x12000, scoped, tag = 'internal scratch']
  %s0 = inlined_call_operand.vmem [shape: f32[16,128], index: 0, kind: input, shape index: {}]
  %s1 = inlined_call_operand.vmem [shape: f32[32,16], index: 1, kind: input, shape index: {}]
  %s2 = inlined_call_operand.vmem [shape: f32[32,1], index: 2, kind: input, shape index: {}]
  %s3 = inlined_call_operand.vmem [shape: f32[32,32], index: 3, kind: input, shape index: {}]
  %s4 = inlined_call_operand.vmem [shape: f32[32,1], index: 4, kind: input, shape index: {}]
  %s5 = inlined_call_operand.vmem [shape: f32[4,32], index: 5, kind: input, shape index: {}]
  %s6 = inlined_call_operand.vmem [shape: f32[4,1], index: 6, kind: input, shape index: {}]
  %s7 = inlined_call_operand.hbm [shape: f32[5,128], index: 7, kind: output, shape index: {}]
  %s8 = sld [smem:[#allocation0]]
  $region38: #{tpu_custom_call.1} parent=0
    _
  %s10 = ssub.s32 1, %s8
  %s11 = scalar_select 0, %s10, %s8
  $region1: #{tpu_custom_call.1} parent=0
    #allocation2 [shape = 'u8[4096]{0}', space=vmem, size = 0x1000, scoped, tag = 'output window, operand 0, single buffered']
    #allocation3 [shape = 's32[1]{0}', space=sflag, size = 0x4, scoped, tag = 'scoped memory for tpu_custom_call.1']
    %12 = vsyncpa [#allocation3], 0
    // Predicated region
    $region2: #{tpu_custom_call.1} parent=1 // pred_check
      _
    $region3: #{tpu_custom_call.1} parent=1 // pred_check_branch
      %14 = sbr.rel (0) target = $region5
    $region4: #{tpu_custom_call.1} parent=1 // pred_region
      _
    $region5: #{tpu_custom_call.1} parent=1 // pred_fallthru
      _
    // Predicated region
    $region6: #{tpu_custom_call.1} parent=1 // pred_check
      _
    $region7: #{tpu_custom_call.1} parent=1 // pred_check_branch
      %16 = sbr.rel (0) target = $region9
    $region8: #{tpu_custom_call.1} parent=1 // pred_region
      _
    $region9: #{tpu_custom_call.1} parent=1 // pred_fallthru
      _
    // Predicated region
    $region10: #{tpu_custom_call.1} parent=1 // pred_check
      _
    $region11: #{tpu_custom_call.1} parent=1 // pred_check_branch
      %18 = sbr.rel (0) target = $region13
    $region12: #{tpu_custom_call.1} parent=1 // pred_region
      _
    $region13: #{tpu_custom_call.1} parent=1 // pred_fallthru
      _
    // Predicated region
    $region14: #{tpu_custom_call.1} parent=1 // pred_check
      _
    $region15: #{tpu_custom_call.1} parent=1 // pred_check_branch
      %20 = sbr.rel (0) target = $region17
    $region16: #{tpu_custom_call.1} parent=1 // pred_region
      _
    $region17: #{tpu_custom_call.1} parent=1 // pred_fallthru
      _
    // Predicated region
    $region18: #{tpu_custom_call.1} parent=1 // pred_check
      _
    $region19: #{tpu_custom_call.1} parent=1 // pred_check_branch
      %22 = sbr.rel (0) target = $region21
    $region20: #{tpu_custom_call.1} parent=1 // pred_region
      _
    $region21: #{tpu_custom_call.1} parent=1 // pred_fallthru
      _
    // Predicated region
    $region22: #{tpu_custom_call.1} parent=1 // pred_check
      _
    $region23: #{tpu_custom_call.1} parent=1 // pred_check_branch
      %24 = sbr.rel (0) target = $region25
    $region24: #{tpu_custom_call.1} parent=1 // pred_region
      _
    $region25: #{tpu_custom_call.1} parent=1 // pred_fallthru
      _
    // Predicated region
    $region26: #{tpu_custom_call.1} parent=1 // pred_check
      _
    $region27: #{tpu_custom_call.1} parent=1 // pred_check_branch
      %26 = sbr.rel (0) target = $region29
    $region28: #{tpu_custom_call.1} parent=1 // pred_region
      _
    $region29: #{tpu_custom_call.1} parent=1 // pred_fallthru
      _
    %v27 = vld [vmem:[%s0] sm:$0xff]
    %v28 = vld [vmem:[%s0 + $0x8] sm:$0xff]
    %v29 = vld [vmem:[%s1] sm:$0xff]
    %v30 = vld [vmem:[%s1 + $0x8] sm:$0xff]
    %v31 = vld [vmem:[%s1 + $0x10] sm:$0xff]
    %v32 = vld [vmem:[%s1 + $0x18] sm:$0xff]
    %v33 = vld [vmem:[%s2] sm:$0xff]
    %v34 = vld [vmem:[%s2 + $0x8] sm:$0xff]
    %v35 = vld [vmem:[%s2 + $0x10] sm:$0xff]
    %v36 = vld [vmem:[%s2 + $0x18] sm:$0xff]
    %38 = vset.pattern.permute.xlu0 0
    %39 = vperm.xlu0 %38, %v33
    %v40 = vpop.permute.xlu0 %39
    %43 = vset.pattern.permute.xlu0 0
    %44 = vperm.xlu0 %43, %v34
    %v45 = vpop.permute.xlu0 %44
    %48 = vset.pattern.permute.xlu0 0
    %49 = vperm.xlu0 %48, %v35
    %v50 = vpop.permute.xlu0 %49
    %53 = vset.pattern.permute.xlu0 0
    %54 = vperm.xlu0 %53, %v36
    %v55 = vpop.permute.xlu0 %54
    %vm57 = vcmask 130048
    %v59 = vsel %vm57, %v29, 0
    %v62 = vsel %vm57, %v30, 0
    %v65 = vsel %vm57, %v31, 0
    %v68 = vsel %vm57, %v32, 0
    %70 = vmatprep.subr.mxu0 0.0
    %71 = vmatpush1.msra.mxu0 %v27
    %72 = vmatprep.subr.mxu0 0.0
    %73 = vmatpush1.msra.mxu0 %v28
    %74 = vmatprep.subr.mxu0 0.0
    %75 = vmatpush1.msra.mxu0 0.0
    %76 = vmatprep.subr.mxu0 0.0
    %77 = vmatpush1.msra.mxu0 0.0
    %78 = vmatprep.subr.mxu0 0.0
    %79 = vmatpush1.msra.mxu0 0.0
    %80 = vmatprep.subr.mxu0 0.0
    %81 = vmatpush1.msra.mxu0 0.0
    %82 = vmatprep.subr.mxu0 0.0
    %83 = vmatpush1.msra.mxu0 0.0
    %84 = vmatprep.subr.mxu0 0.0
    %85 = vmatpush1.msra.mxu0 0.0
    %86 = vmatprep.subr.mxu0 0.0
    %87 = vmatpush1.msra.mxu0 0.0
    %88 = vmatprep.subr.mxu0 0.0
    %89 = vmatpush1.msra.mxu0 0.0
    %90 = vmatprep.subr.mxu0 0.0
    %91 = vmatpush1.msra.mxu0 0.0
    %92 = vmatprep.subr.mxu0 0.0
    %93 = vmatpush1.msra.mxu0 0.0
    %94 = vmatprep.subr.mxu0 0.0
    %95 = vmatpush1.msra.mxu0 0.0
    %96 = vmatprep.subr.mxu0 0.0
    %97 = vmatpush1.msra.mxu0 0.0
    %98 = vmatprep.subr.mxu0 0.0
    %99 = vmatpush1.msra.mxu0 0.0
    %100 = vmatprep.subr.mxu0 0.0
    %101 = vmatpush1.msra.mxu0 0.0
    %102 = vmatprep.subr.mxu0 0.0
    %103 = vmatpush1.msra.mxu0 0.0
    %104 = vmatprep.subr.mxu0 0.0
    %105 = vmatpush1.msra.mxu0 0.0
    %106 = vmatprep.subr.mxu0 0.0
    %107 = vmatpush1.msra.mxu0 0.0
    %108 = vmatprep.subr.mxu0 0.0
    %109 = vmatpush1.msra.mxu0 0.0
    %110 = vmatprep.subr.mxu0 0.0
    %111 = vmatpush1.msra.mxu0 0.0
    %112 = vmatprep.subr.mxu0 0.0
    %113 = vmatpush1.msra.mxu0 0.0
    %114 = vmatprep.subr.mxu0 0.0
    %115 = vmatpush1.msra.mxu0 0.0
    %116 = vmatprep.subr.mxu0 0.0
    %117 = vmatpush1.msra.mxu0 0.0
    %118 = vmatprep.subr.mxu0 0.0
    %119 = vmatpush1.msra.mxu0 0.0
    %120 = vmatprep.subr.mxu0 0.0
    %121 = vmatpush1.msra.mxu0 0.0
    %122 = vmatprep.subr.mxu0 0.0
    %123 = vmatpush1.msra.mxu0 0.0
    %124 = vmatprep.subr.mxu0 0.0
    %125 = vmatpush1.msra.mxu0 0.0
    %126 = vmatprep.subr.mxu0 0.0
    %127 = vmatpush1.msra.mxu0 0.0
    %128 = vmatprep.subr.mxu0 0.0
    %129 = vmatpush1.msra.mxu0 0.0
    %130 = vmatprep.subr.mxu0 0.0
    %131 = vmatpush1.msra.mxu0 0.0
    %132 = vmatprep.subr.mxu0 0.0
    %133 = vmatpush1.msra.mxu0 0.0
    %134 = vmatprep.mubr.f32.mxu0 0.0
    %135 = vmatmul.mubr.f32.gmra.mrb[0].mxu0 %v59
    %v136 = vpop.f32.mrb[0].mxu0
    %v137 = vadd.f32 %v40, %v136
    %v138 = vpop.f32.mrb[0].mxu0
    %139 = vmatprep.mubr.f32.mxu0 0.0
    %140 = vmatmul.mubr.f32.gmra.mrb[0].mxu0 %v62
    %v141 = vpop.f32.mrb[0].mxu0
    %v142 = vadd.f32 %v45, %v141
    %v143 = vpop.f32.mrb[0].mxu0
    %144 = vmatprep.mubr.f32.mxu0 0.0
    %145 = vmatmul.mubr.f32.gmra.mrb[0].mxu0 %v65
    %v146 = vpop.f32.mrb[0].mxu0
    %v147 = vadd.f32 %v50, %v146
    %v148 = vpop.f32.mrb[0].mxu0
    %149 = vmatprep.mubr.f32.mxu0 0.0
    %150 = vmatmul.mubr.f32.gmra.mrb[0].mxu0 %v68
    %v151 = vpop.f32.mrb[0].mxu0
    %v152 = vadd.f32 %v55, %v151
    %v153 = vpop.f32.mrb[0].mxu0
    %154 = vdwg.mxu0
    %v155 = vtanh.pop %v137
    %v156 = vtanh.pop %v142
    %v157 = vtanh.pop %v147
    %v158 = vtanh.pop %v152
    %v159 = vld [vmem:[%s3] sm:$0xff]
    %v160 = vld [vmem:[%s3 + $0x8] sm:$0xff]
    %v161 = vld [vmem:[%s3 + $0x10] sm:$0xff]
    %v162 = vld [vmem:[%s3 + $0x18] sm:$0xff]
    %v163 = vld [vmem:[%s4] sm:$0xff]
    %v164 = vld [vmem:[%s4 + $0x8] sm:$0xff]
    %v165 = vld [vmem:[%s4 + $0x10] sm:$0xff]
    %v166 = vld [vmem:[%s4 + $0x18] sm:$0xff]
    %168 = vset.pattern.permute.xlu0 0
    %169 = vperm.xlu0 %168, %v163
    %v170 = vpop.permute.xlu0 %169
    %173 = vset.pattern.permute.xlu0 0
    %174 = vperm.xlu0 %173, %v164
    %v175 = vpop.permute.xlu0 %174
    %178 = vset.pattern.permute.xlu0 0
    %179 = vperm.xlu0 %178, %v165
    %v180 = vpop.permute.xlu0 %179
    %183 = vset.pattern.permute.xlu0 0
    %184 = vperm.xlu0 %183, %v166
    %v185 = vpop.permute.xlu0 %184
    %vm187 = vcmask 261120
    %v189 = vsel %vm187, %v159, 0
    %v192 = vsel %vm187, %v160, 0
    %v195 = vsel %vm187, %v161, 0
    %v198 = vsel %vm187, %v162, 0
    %200 = vmatprep.subr.mxu0 0.0
    %201 = vmatpush1.msra.mxu0 %v155
    %202 = vmatprep.subr.mxu0 0.0
    %203 = vmatpush1.msra.mxu0 %v156
    %204 = vmatprep.subr.mxu0 0.0
    %205 = vmatpush1.msra.mxu0 %v157
    %206 = vmatprep.subr.mxu0 0.0
    %207 = vmatpush1.msra.mxu0 %v158
    %208 = vmatprep.subr.mxu0 0.0
    %209 = vmatpush1.msra.mxu0 0.0
    %210 = vmatprep.subr.mxu0 0.0
    %211 = vmatpush1.msra.mxu0 0.0
    %212 = vmatprep.subr.mxu0 0.0
    %213 = vmatpush1.msra.mxu0 0.0
    %214 = vmatprep.subr.mxu0 0.0
    %215 = vmatpush1.msra.mxu0 0.0
    %216 = vmatprep.subr.mxu0 0.0
    %217 = vmatpush1.msra.mxu0 0.0
    %218 = vmatprep.subr.mxu0 0.0
    %219 = vmatpush1.msra.mxu0 0.0
    %220 = vmatprep.subr.mxu0 0.0
    %221 = vmatpush1.msra.mxu0 0.0
    %222 = vmatprep.subr.mxu0 0.0
    %223 = vmatpush1.msra.mxu0 0.0
    %224 = vmatprep.subr.mxu0 0.0
    %225 = vmatpush1.msra.mxu0 0.0
    %226 = vmatprep.subr.mxu0 0.0
    %227 = vmatpush1.msra.mxu0 0.0
    %228 = vmatprep.subr.mxu0 0.0
    %229 = vmatpush1.msra.mxu0 0.0
    %230 = vmatprep.subr.mxu0 0.0
    %231 = vmatpush1.msra.mxu0 0.0
    %232 = vmatprep.subr.mxu0 0.0
    %233 = vmatpush1.msra.mxu0 0.0
    %234 = vmatprep.subr.mxu0 0.0
    %235 = vmatpush1.msra.mxu0 0.0
    %236 = vmatprep.subr.mxu0 0.0
    %237 = vmatpush1.msra.mxu0 0.0
    %238 = vmatprep.subr.mxu0 0.0
    %239 = vmatpush1.msra.mxu0 0.0
    %240 = vmatprep.subr.mxu0 0.0
    %241 = vmatpush1.msra.mxu0 0.0
    %242 = vmatprep.subr.mxu0 0.0
    %243 = vmatpush1.msra.mxu0 0.0
    %244 = vmatprep.subr.mxu0 0.0
    %245 = vmatpush1.msra.mxu0 0.0
    %246 = vmatprep.subr.mxu0 0.0
    %247 = vmatpush1.msra.mxu0 0.0
    %248 = vmatprep.subr.mxu0 0.0
    %249 = vmatpush1.msra.mxu0 0.0
    %250 = vmatprep.subr.mxu0 0.0
    %251 = vmatpush1.msra.mxu0 0.0
    %252 = vmatprep.subr.mxu0 0.0
    %253 = vmatpush1.msra.mxu0 0.0
    %254 = vmatprep.subr.mxu0 0.0
    %255 = vmatpush1.msra.mxu0 0.0
    %256 = vmatprep.subr.mxu0 0.0
    %257 = vmatpush1.msra.mxu0 0.0
    %258 = vmatprep.subr.mxu0 0.0
    %259 = vmatpush1.msra.mxu0 0.0
    %260 = vmatprep.subr.mxu0 0.0
    %261 = vmatpush1.msra.mxu0 0.0
    %262 = vmatprep.subr.mxu0 0.0
    %263 = vmatpush1.msra.mxu0 0.0
    %264 = vmatprep.mubr.f32.mxu0 0.0
    %265 = vmatmul.mubr.f32.gmra.mrb[0].mxu0 %v189
    %v266 = vpop.f32.mrb[0].mxu0
    %v267 = vadd.f32 %v170, %v266
    %v268 = vpop.f32.mrb[0].mxu0
    %269 = vmatprep.mubr.f32.mxu0 0.0
    %270 = vmatmul.mubr.f32.gmra.mrb[0].mxu0 %v192
    %v271 = vpop.f32.mrb[0].mxu0
    %v272 = vadd.f32 %v175, %v271
    %v273 = vpop.f32.mrb[0].mxu0
    %274 = vmatprep.mubr.f32.mxu0 0.0
    %275 = vmatmul.mubr.f32.gmra.mrb[0].mxu0 %v195
    %v276 = vpop.f32.mrb[0].mxu0
    %v277 = vadd.f32 %v180, %v276
    %v278 = vpop.f32.mrb[0].mxu0
    %279 = vmatprep.mubr.f32.mxu0 0.0
    %280 = vmatmul.mubr.f32.gmra.mrb[0].mxu0 %v198
    %v281 = vpop.f32.mrb[0].mxu0
    %v282 = vadd.f32 %v185, %v281
    %v283 = vpop.f32.mrb[0].mxu0
    %284 = vdwg.mxu0
    %v285 = vtanh.pop %v267
    %v286 = vtanh.pop %v272
    %v287 = vtanh.pop %v277
    %v288 = vtanh.pop %v282
    %v289 = vld [vmem:[%s5] sm:$0xf]
    %v290 = vld [vmem:[%s6] sm:$0xf]
    %292 = vset.pattern.permute.xlu0 0
    %293 = vperm.xlu0 %292, %v290
    %v294 = vpop.permute.xlu0 %293
    %v297 = vsel %vm187, %v289, 0
    %299 = vmatprep.subr.mxu0 0.0
    %300 = vmatpush1.msra.mxu0 %v285
    %301 = vmatprep.subr.mxu0 0.0
    %302 = vmatpush1.msra.mxu0 %v286
    %303 = vmatprep.subr.mxu0 0.0
    %304 = vmatpush1.msra.mxu0 %v287
    %305 = vmatprep.subr.mxu0 0.0
    %306 = vmatpush1.msra.mxu0 %v288
    %307 = vmatprep.subr.mxu0 0.0
    %308 = vmatpush1.msra.mxu0 0.0
    %309 = vmatprep.subr.mxu0 0.0
    %310 = vmatpush1.msra.mxu0 0.0
    %311 = vmatprep.subr.mxu0 0.0
    %312 = vmatpush1.msra.mxu0 0.0
    %313 = vmatprep.subr.mxu0 0.0
    %314 = vmatpush1.msra.mxu0 0.0
    %315 = vmatprep.subr.mxu0 0.0
    %316 = vmatpush1.msra.mxu0 0.0
    %317 = vmatprep.subr.mxu0 0.0
    %318 = vmatpush1.msra.mxu0 0.0
    %319 = vmatprep.subr.mxu0 0.0
    %320 = vmatpush1.msra.mxu0 0.0
    %321 = vmatprep.subr.mxu0 0.0
    %322 = vmatpush1.msra.mxu0 0.0
    %323 = vmatprep.subr.mxu0 0.0
    %324 = vmatpush1.msra.mxu0 0.0
    %325 = vmatprep.subr.mxu0 0.0
    %326 = vmatpush1.msra.mxu0 0.0
    %327 = vmatprep.subr.mxu0 0.0
    %328 = vmatpush1.msra.mxu0 0.0
    %329 = vmatprep.subr.mxu0 0.0
    %330 = vmatpush1.msra.mxu0 0.0
    %331 = vmatprep.subr.mxu0 0.0
    %332 = vmatpush1.msra.mxu0 0.0
    %333 = vmatprep.subr.mxu0 0.0
    %334 = vmatpush1.msra.mxu0 0.0
    %335 = vmatprep.subr.mxu0 0.0
    %336 = vmatpush1.msra.mxu0 0.0
    %337 = vmatprep.subr.mxu0 0.0
    %338 = vmatpush1.msra.mxu0 0.0
    %339 = vmatprep.subr.mxu0 0.0
    %340 = vmatpush1.msra.mxu0 0.0
    %341 = vmatprep.subr.mxu0 0.0
    %342 = vmatpush1.msra.mxu0 0.0
    %343 = vmatprep.subr.mxu0 0.0
    %344 = vmatpush1.msra.mxu0 0.0
    %345 = vmatprep.subr.mxu0 0.0
    %346 = vmatpush1.msra.mxu0 0.0
    %347 = vmatprep.subr.mxu0 0.0
    %348 = vmatpush1.msra.mxu0 0.0
    %349 = vmatprep.subr.mxu0 0.0
    %350 = vmatpush1.msra.mxu0 0.0
    %351 = vmatprep.subr.mxu0 0.0
    %352 = vmatpush1.msra.mxu0 0.0
    %353 = vmatprep.subr.mxu0 0.0
    %354 = vmatpush1.msra.mxu0 0.0
    %355 = vmatprep.subr.mxu0 0.0
    %356 = vmatpush1.msra.mxu0 0.0
    %357 = vmatprep.subr.mxu0 0.0
    %358 = vmatpush1.msra.mxu0 0.0
    %359 = vmatprep.subr.mxu0 0.0
    %360 = vmatpush1.msra.mxu0 0.0
    %361 = vmatprep.subr.mxu0 0.0
    %362 = vmatpush1.msra.mxu0 0.0
    %363 = vmatprep.mubr.f32.mxu0 0.0
    %364 = vmatmul.mubr.f32.gmra.mrb[0].mxu0 %v297
    %v365 = vpop.f32.mrb[0].mxu0
    %v366 = vadd.f32 %v294, %v365
    %v367 = vpop.f32.mrb[0].mxu0
    %368 = vdwg.mxu0
    %v369 = vtanh.pop %v366
    %v370 = vlaneseq
    %v371 = vshrl.u32 %v370, 7
    %vm372 = vcmp.lt.s32.totalorder %v371, 3
    %v373 = vmul.f32 %v369, 3.1415927
    %v374 = vadd.f32 %v369, 1.0
    %v375 = vmul.f32 %v374, 0.5
    %v376 = vmul.f32 %v375, 2.0
    %v377 = vsel %vm372, %v373, %v376
    %v378 = vmul.f32 %v369, %v369
    %v379 = vmin.f32 %v378, 0.9999999
    %v380 = vsub.f32 0.0, %v379
    %v381 = vadd.f32 %v380, 1.0
    %v382 = vlog2.pop %v381
    %v383 = vmul.f32 %v382, 0.6931472
    %v384 = vmul.f32 -0.5, %v380
    %v385 = vadd.f32 %v384, 1.0
    %v386 = vmul.f32 %v385, %v380
    %v387 = vand.u32 2147483647, %v380
    %vm388 = vcmp.lt.f32.partialorder %v387, 0.0004427343
    %v389 = vsel %vm388, %v386, %v383
    %vm390 = vcmask 1043456
    %v391 = vsel %vm390, %v389, 0.0
    %v392 = vrot.slane %v391, 4
    %v393 = vadd.f32 %v391, %v392
    %v394 = vrot.slane %v393, 2
    %v395 = vadd.f32 %v393, %v394
    %v396 = vrot.slane %v395, 1
    %v397 = vadd.f32 %v395, %v396
    %v398 = vsub.f32 0.0, %v397
    %v399 = vsel %vm390, %v377, %v398
    %400 = vst [vmem:[#allocation2] sm:$0x1f] %v399
    // Predicated region
    $region30: #{tpu_custom_call.1} parent=1 // pred_check
      _
    $region31: #{tpu_custom_call.1} parent=1 // pred_check_branch
      %402 = sbr.rel (0) target = $region33
    $region32: #{tpu_custom_call.1} parent=1 // pred_region
      %s404 = ssub.s32 128, 128
      %405 = vsyncadd [#allocation3], %s404
      %s407 = sshll.u32 [#allocation2], 4
      %s408 = int_to_ptr.vmem [resolvable:$true] %s407
      %410 = dma.vmem_to_hbm [thread:$0]  %s408, 128, %s7, [#allocation3]
    $region33: #{tpu_custom_call.1} parent=1 // pred_fallthru
      _
    // Predicated region
    $region34: #{tpu_custom_call.1} parent=1 // pred_check
      _
    $region35: #{tpu_custom_call.1} parent=1 // pred_check_branch
      %412 = sbr.rel (0) target = $region37
    $region36: #{tpu_custom_call.1} parent=1 // pred_region
      %413 = dma.done [#allocation3], 128
    $region37: #{tpu_custom_call.1} parent=1 // pred_fallthru
      _
    %414 = vsyncpa [#allocation3], 1

</llo_original>
